<compile_context>
chip_gen: v6e
topology: v6e:2x2x1
jax: 0.10.0
libtpu: 0.0.40
codegen_flags: <defaults>
</compile_context>

<pallas_src>
import functools

import jax
import jax.numpy as jnp
from jax import lax
from jax.experimental import pallas as pl
from jax.experimental.pallas import tpu as pltpu

_HI = lax.Precision.HIGHEST


def self_attention_kernel(x_ref, wqk_ref, bqk_ref, o_ref, *, d1):
    x = x_ref[...]                                   # (B, d1 + d2)
    v1 = x[:, :d1]                                   # (B, d1) static lane slice

    # One projection matmul for both Q and K (block-diagonal packed weight).
    proj = jnp.dot(x, wqk_ref[...],
                   preferred_element_type=jnp.float32,
                   precision=_HI) + bqk_ref[...]     # (B, 2*d1)
    q = proj[:, :d1]                                 # (B, d1)
    k = proj[:, d1:]                                 # (B, d1)

    # Attention scores S = Q @ K.T without an explicit transpose:
    # contract axis 1 of q with axis 1 of k.
    s = lax.dot_general(q, k, (((1,), (1,)), ((), ())),
                        preferred_element_type=jnp.float32,
                        precision=_HI)               # (B, B)

    # Numerically-stable softmax over last axis (exact division; the approx
    # EUP reciprocal was too coarse for the accuracy check).
    s = s - jnp.max(s, axis=-1, keepdims=True)
    p = jnp.exp(s)
    w = p / jnp.sum(p, axis=-1, keepdims=True)

    # Weighted sum over the batch of v1 rows -> (B, d1)
    o_ref[...] = jnp.dot(w, v1, preferred_element_type=jnp.float32,
                         precision=_HI)


def pack_params(wq, bq, wk, bk):
    """Pack (out, in)-layout PyTorch Linear params into one block-diagonal
    (d1+d2, 2*d1) weight and one (1, 2*d1) bias. Do this ONCE at init."""
    d1 = wq.shape[0]          # query_linear: (d1, d1)
    d2 = wk.shape[1]          # key_linear:   (d1, d2)
    w = jnp.zeros((d1 + d2, 2 * d1), dtype=jnp.float32)
    w = w.at[:d1, :d1].set(wq.T)          # v1 -> Q columns [0, d1)
    w = w.at[d1:, d1:].set(wk.T)          # v2 -> K columns [d1, 2*d1)
    b = jnp.concatenate([bq, bk]).reshape(1, 2 * d1)
    return w, b


def self_attention_forward(x, wqk_packed, bqk_packed, *, d1):
    """x: (B, d1 + d2) float32. wqk_packed: (d1+d2, 2*d1). bqk_packed: (1, 2*d1)."""
    B = x.shape[0]
    vmem = pl.BlockSpec(memory_space=pltpu.MemorySpace.VMEM)
    return pl.pallas_call(
        functools.partial(self_attention_kernel, d1=d1),
        out_shape=jax.ShapeDtypeStruct((B, d1), jnp.float32),
        in_specs=[vmem, vmem, vmem],
        out_specs=vmem,
    )(x, wqk_packed, bqk_packed)


def _reference(x, wq, bq, wk, bk, d1):
    v1, v2 = x[:, :d1], x[:, d1:]
    q = jnp.dot(v1, wq.T, precision=_HI) + bq
    k = jnp.dot(v2, wk.T, precision=_HI) + bk
    s = jnp.dot(q, k.T, precision=_HI)
    w = jax.nn.softmax(s, axis=-1)
    return jnp.dot(w, v1, precision=_HI)


if __name__ == "__main__":
    # NOTE: vector1.register_hook in the PyTorch module only affects backward;
    # it is a no-op for the forward pass and is intentionally omitted.
    B, d1, d2 = 8, 32, 16                  # input_size1=32, input_size2=16
    key = jax.random.PRNGKey(0)
    kx, kwq, kbq, kwk, kbk = jax.random.split(key, 5)

    x = jax.random.normal(kx, (B, d1 + d2), dtype=jnp.float32)

    # Deterministic init mimicking nn.Linear default: U(-1/sqrt(fan_in), 1/sqrt(fan_in))
    lim_q = 1.0 / jnp.sqrt(jnp.float32(d1))
    lim_k = 1.0 / jnp.sqrt(jnp.float32(d2))
    wq = jax.random.uniform(kwq, (d1, d1), jnp.float32, -lim_q, lim_q)
    bq = jax.random.uniform(kbq, (d1,), jnp.float32, -lim_q, lim_q)
    wk = jax.random.uniform(kwk, (d1, d2), jnp.float32, -lim_k, lim_k)
    bk = jax.random.uniform(kbk, (d1,), jnp.float32, -lim_k, lim_k)

    # One-time packing (corresponds to module __init__).
    wqk_packed, bqk_packed = pack_params(wq, bq, wk, bk)

    out = self_attention_forward(x, wqk_packed, bqk_packed, d1=d1)
    out = jax.block_until_ready(out)

    ref = _reference(x, wq, bq, wk, bk, d1)
    assert out.shape == (B, d1)
    assert jnp.allclose(out, ref, atol=1e-4, rtol=1e-4), "mismatch vs reference"

    print("KERNEL_OK")
</pallas_src>

<mosaic_0001>
module attributes {stable_mosaic.version = 11 : i64} {
  func.func @self_attention_kernel(%arg0: memref<8x48xf32, #tpu.memory_space<vmem>>, %arg1: memref<48x64xf32, #tpu.memory_space<vmem>>, %arg2: memref<1x64xf32, #tpu.memory_space<vmem>>, %arg3: memref<8x32xf32, #tpu.memory_space<vmem>>) attributes {dimension_semantics = [], scalar_prefetch = 0 : i64, scratch_operands = 0 : i64, tpu.core_type = #tpu.core_type<tc>} {
    %c0 = arith.constant 0 : index
    %c0_0 = arith.constant 0 : index
    %0 = vector.load %arg0[%c0, %c0_0] : memref<8x48xf32, #tpu.memory_space<vmem>>, vector<8x48xf32>
    %1 = vector.extract_strided_slice %0 {offsets = [0, 0], sizes = [8, 32], strides = [1, 1]} : vector<8x48xf32> to vector<8x32xf32>
    %c0_1 = arith.constant 0 : index
    %c0_2 = arith.constant 0 : index
    %2 = vector.load %arg1[%c0_1, %c0_2] : memref<48x64xf32, #tpu.memory_space<vmem>>, vector<48x64xf32>
    %cst = arith.constant dense<0.000000e+00> : vector<8x64xf32>
    %3 = tpu.matmul %0, %2, %cst {dimension_numbers = #tpu.dot_dimension_numbers<[1], [0], [0], [1], [0, 0, 1, 1], [], []>, precision = #tpu.contract_precision<fp32>} : vector<8x48xf32>, vector<48x64xf32>, vector<8x64xf32> -> vector<8x64xf32>
    %c0_3 = arith.constant 0 : index
    %c0_4 = arith.constant 0 : index
    %4 = vector.load %arg2[%c0_3, %c0_4] : memref<1x64xf32, #tpu.memory_space<vmem>>, vector<1x64xf32>
    %5 = vector.broadcast %4 : vector<1x64xf32> to vector<8x64xf32>
    %6 = arith.addf %3, %5 : vector<8x64xf32>
    %7 = vector.extract_strided_slice %6 {offsets = [0, 0], sizes = [8, 32], strides = [1, 1]} : vector<8x64xf32> to vector<8x32xf32>
    %8 = vector.extract_strided_slice %6 {offsets = [0, 32], sizes = [8, 32], strides = [1, 1]} : vector<8x64xf32> to vector<8x32xf32>
    %cst_5 = arith.constant dense<0.000000e+00> : vector<8x8xf32>
    %9 = tpu.matmul %7, %8, %cst_5 {dimension_numbers = #tpu.dot_dimension_numbers<[1], [1], [0], [0], [0, 0, 1, 0], [], []>, precision = #tpu.contract_precision<fp32>} : vector<8x32xf32>, vector<8x32xf32>, vector<8x8xf32> -> vector<8x8xf32>
    %cst_6 = arith.constant dense<0xFF800000> : vector<8xf32>
    %10 = vector.multi_reduction <maximumf>, %9, %cst_6 [1] : vector<8x8xf32> to vector<8xf32>
    %11 = vector.shape_cast %10 : vector<8xf32> to vector<8x1xf32>
    %12 = vector.broadcast %11 : vector<8x1xf32> to vector<8x8xf32>
    %13 = arith.subf %9, %12 : vector<8x8xf32>
    %14 = math.exp %13 : vector<8x8xf32>
    %cst_7 = arith.constant dense<0.000000e+00> : vector<8xf32>
    %15 = vector.multi_reduction <add>, %14, %cst_7 [1] : vector<8x8xf32> to vector<8xf32>
    %16 = vector.shape_cast %15 : vector<8xf32> to vector<8x1xf32>
    %17 = vector.broadcast %16 : vector<8x1xf32> to vector<8x8xf32>
    %18 = arith.divf %14, %17 : vector<8x8xf32>
    %cst_8 = arith.constant dense<0.000000e+00> : vector<8x32xf32>
    %19 = tpu.matmul %18, %1, %cst_8 {dimension_numbers = #tpu.dot_dimension_numbers<[1], [0], [0], [1], [0, 0, 1, 1], [], []>, precision = #tpu.contract_precision<fp32>} : vector<8x8xf32>, vector<8x32xf32>, vector<8x32xf32> -> vector<8x32xf32>
    %c0_9 = arith.constant 0 : index
    %c0_10 = arith.constant 0 : index
    %20 = vector.load %arg3[%c0_9, %c0_10] : memref<8x32xf32, #tpu.memory_space<vmem>>, vector<8x32xf32>
    tpu.vector_store %arg3[%c0_9, %c0_10], %19 {strides = array<i32>} : memref<8x32xf32, #tpu.memory_space<vmem>>, vector<8x32xf32>,
    return
  }
}

</mosaic_0001>

<llo_original>
// kernel: tpu_custom_call.1
$region0: #{tpu_custom_call.1}
  #allocation0 [shape = 'u32[]', space=smem, size = 0x4, offset = 0x4, fixed_abs, tag = 'smem constant byte address 0x4 - core index']
  #allocation1 [shape = 'u32[144,128]{1,0:T(1,128)}', space=vmem, size = 0x12000, scoped, tag = 'internal scratch']
  %s0 = inlined_call_operand.hbm [shape: f32[8,48], index: 0, kind: input, shape index: {}]
  %s1 = inlined_call_operand.hbm [shape: f32[48,64], index: 1, kind: input, shape index: {}]
  %s2 = inlined_call_operand.vmem [shape: f32[1,64], index: 2, kind: input, shape index: {}]
  %s3 = inlined_call_operand.hbm [shape: f32[8,32], index: 3, kind: output, shape index: {}]
  %s4 = sld [smem:[#allocation0]]
  $region30: #{tpu_custom_call.1} parent=0
    _
  %s6 = ssub.s32 1, %s4
  %s7 = scalar_select 0, %s6, %s4
  $region1: #{tpu_custom_call.1} parent=0
    #allocation2 [shape = 'u8[4096]{0}', space=vmem, size = 0x1000, scoped, tag = 'input window, operand 0, single buffered']
    #allocation3 [shape = 's32[1]{0}', space=sflag, size = 0x4, scoped, tag = 'scoped memory for tpu_custom_call.1']
    #allocation4 [shape = 's32[1]{0}', space=sflag, size = 0x4, scoped, tag = 'scoped memory for tpu_custom_call.1']
    #allocation5 [shape = 'u8[24576]{0}', space=vmem, size = 0x6000, scoped, tag = 'input window, operand 1, single buffered']
    #allocation6 [shape = 's32[1]{0}', space=sflag, size = 0x4, scoped, tag = 'scoped memory for tpu_custom_call.1']
    #allocation7 [shape = 'u8[4096]{0}', space=vmem, size = 0x1000, scoped, tag = 'output window, operand 0, single buffered']
    %8 = vsyncpa [#allocation3], 0
    %9 = vsyncpa [#allocation6], 0
    %10 = vsyncpa [#allocation4], 0
    // Predicated region
    $region2: #{tpu_custom_call.1} parent=1 // pred_check
      _
    $region3: #{tpu_custom_call.1} parent=1 // pred_check_branch
      %12 = sbr.rel (0) target = $region5
    $region4: #{tpu_custom_call.1} parent=1 // pred_region
      %s14 = ssub.s32 128, 128
      %15 = vsyncadd [#allocation3], %s14
      %s17 = sshll.u32 [#allocation2], 4
      %s18 = int_to_ptr.vmem [resolvable:$true] %s17
      %20 = dma.hbm_to_vmem [thread:$0]  %s0, 128, %s18, [#allocation3]
    $region5: #{tpu_custom_call.1} parent=1 // pred_fallthru
      _
    // Predicated region
    $region6: #{tpu_custom_call.1} parent=1 // pred_check
      _
    $region7: #{tpu_custom_call.1} parent=1 // pred_check_branch
      %22 = sbr.rel (0) target = $region9
    $region8: #{tpu_custom_call.1} parent=1 // pred_region
      %s24 = ssub.s32 768, 768
      %25 = vsyncadd [#allocation6], %s24
      %s26 = sshll.u32 [#allocation5], 4
      %s27 = int_to_ptr.vmem [resolvable:$true] %s26
      %32 = dma.hbm_to_vmem [thread:$0]  %s1, 768, %s27, [#allocation6], 128, 128, 8
    $region9: #{tpu_custom_call.1} parent=1 // pred_fallthru
      _
    // Predicated region
    $region10: #{tpu_custom_call.1} parent=1 // pred_check
      _
    $region11: #{tpu_custom_call.1} parent=1 // pred_check_branch
      %34 = sbr.rel (0) target = $region13
    $region12: #{tpu_custom_call.1} parent=1 // pred_region
      _
    $region13: #{tpu_custom_call.1} parent=1 // pred_fallthru
      _
    // Predicated region
    $region14: #{tpu_custom_call.1} parent=1 // pred_check
      _
    $region15: #{tpu_custom_call.1} parent=1 // pred_check_branch
      %36 = sbr.rel (0) target = $region17
    $region16: #{tpu_custom_call.1} parent=1 // pred_region
      %37 = dma.done [#allocation3], 128
    $region17: #{tpu_custom_call.1} parent=1 // pred_fallthru
      _
    // Predicated region
    $region18: #{tpu_custom_call.1} parent=1 // pred_check
      _
    $region19: #{tpu_custom_call.1} parent=1 // pred_check_branch
      %39 = sbr.rel (0) target = $region21
    $region20: #{tpu_custom_call.1} parent=1 // pred_region
      %40 = dma.done [#allocation6], 768
    $region21: #{tpu_custom_call.1} parent=1 // pred_fallthru
      _
    %v41 = vld [vmem:[#allocation2] sm:$0xff]
    %v42 = vld [vmem:[#allocation5] sm:$0xff]
    %v43 = vld [vmem:[#allocation5 + $0x8] sm:$0xff]
    %v44 = vld [vmem:[#allocation5 + $0x10] sm:$0xff]
    %v45 = vld [vmem:[#allocation5 + $0x18] sm:$0xff]
    %v46 = vld [vmem:[#allocation5 + $0x20] sm:$0xff]
    %v47 = vld [vmem:[#allocation5 + $0x28] sm:$0xff]
    %v48 = vld [vmem:[%s2] sm:$0x1]
    %v50 = vlaneseq
    %v51 = vshrl.u32 %v50, 7
    %v52 = vsub.s32 0, %v51
    %v53 = vrot.slane %v48, %v52
    %vm55 = vcmask 392192
    %v57 = vsel %vm55, %v41, 0
    %59 = vmatprep.subr.mxu0 0.0
    %60 = vmatpush1.msra.mxu0 0.0
    %61 = vmatprep.subr.mxu0 0.0
    %62 = vmatpush1.msra.mxu0 0.0
    %63 = vmatprep.subr.mxu0 0.0
    %64 = vmatpush1.msra.mxu0 0.0
    %65 = vmatprep.subr.mxu0 0.0
    %66 = vmatpush1.msra.mxu0 0.0
    %67 = vmatprep.subr.mxu0 0.0
    %68 = vmatpush1.msra.mxu0 0.0
    %69 = vmatprep.subr.mxu0 0.0
    %70 = vmatpush1.msra.mxu0 0.0
    %71 = vmatprep.subr.mxu0 0.0
    %72 = vmatpush1.msra.mxu0 0.0
    %73 = vmatprep.subr.mxu0 0.0
    %74 = vmatpush1.msra.mxu0 0.0
    %75 = vmatprep.subr.mxu0 0.0
    %76 = vmatpush1.msra.mxu0 0.0
    %77 = vmatprep.subr.mxu0 0.0
    %78 = vmatpush1.msra.mxu0 0.0
    %79 = vmatprep.subr.mxu0 0.0
    %v80 = vand.u32 %v47, 4294901760
    %81 = vmatpush1.msra.mxu0 %v80
    %82 = vmatprep.subr.mxu0 0.0
    %v83 = vand.u32 %v46, 4294901760
    %84 = vmatpush1.msra.mxu0 %v83
    %85 = vmatprep.subr.mxu0 0.0
    %v86 = vand.u32 %v45, 4294901760
    %87 = vmatpush1.msra.mxu0 %v86
    %88 = vmatprep.subr.mxu0 0.0
    %v89 = vand.u32 %v44, 4294901760
    %90 = vmatpush1.msra.mxu0 %v89
    %91 = vmatprep.subr.mxu0 0.0
    %v92 = vand.u32 %v43, 4294901760
    %93 = vmatpush1.msra.mxu0 %v92
    %94 = vmatprep.subr.mxu0 0.0
    %v95 = vand.u32 %v42, 4294901760
    %96 = vmatpush1.msra.mxu0 %v95
    %97 = vmatprep.subr.mxu0 0.0
    %98 = vmatpush2.msra.mxu0 0.0
    %99 = vmatprep.subr.mxu0 0.0
    %100 = vmatpush2.msra.mxu0 0.0
    %101 = vmatprep.subr.mxu0 0.0
    %102 = vmatpush2.msra.mxu0 0.0
    %103 = vmatprep.subr.mxu0 0.0
    %104 = vmatpush2.msra.mxu0 0.0
    %105 = vmatprep.subr.mxu0 0.0
    %106 = vmatpush2.msra.mxu0 0.0
    %107 = vmatprep.subr.mxu0 0.0
    %108 = vmatpush2.msra.mxu0 0.0
    %109 = vmatprep.subr.mxu0 0.0
    %110 = vmatpush2.msra.mxu0 0.0
    %111 = vmatprep.subr.mxu0 0.0
    %112 = vmatpush2.msra.mxu0 0.0
    %113 = vmatprep.subr.mxu0 0.0
    %114 = vmatpush2.msra.mxu0 0.0
    %115 = vmatprep.subr.mxu0 0.0
    %116 = vmatpush2.msra.mxu0 0.0
    %117 = vmatprep.subr.mxu0 0.0
    %118 = vmatpush2.msra.mxu0 0.0
    %119 = vmatprep.subr.mxu0 0.0
    %120 = vmatpush2.msra.mxu0 0.0
    %121 = vmatprep.subr.mxu0 0.0
    %122 = vmatpush2.msra.mxu0 0.0
    %123 = vmatprep.subr.mxu0 0.0
    %124 = vmatpush2.msra.mxu0 0.0
    %125 = vmatprep.subr.mxu0 0.0
    %126 = vmatpush2.msra.mxu0 0.0
    %127 = vmatprep.subr.mxu0 0.0
    %128 = vmatpush2.msra.mxu0 0.0
    %129 = vmatprep.mubr.f32.mxu0 0.0
    %v130 = vand.u32 %v57, 4294901760
    %v131 = vsub.f32 %v57, %v130
    %v132 = vand.u32 %v131, 4294901760
    %v133 = vsub.f32 %v131, %v132
    %v134 = vand.u32 %v133, 4294901760
    %135 = vmatmul.mubr.f32.gmra.mxu0 %v134
    %v136 = vpop.f32.mrf.mxu0
    %v137 = vadd.f32 %v53, %v136
    %v138 = vpop.f32.mrf.mxu0
    %139 = vdwg.mxu0
    %140 = vmatprep.subr.mxu0 0.0
    %141 = vmatpush1.msra.mxu0 0.0
    %142 = vmatprep.subr.mxu0 0.0
    %143 = vmatpush1.msra.mxu0 0.0
    %144 = vmatprep.subr.mxu0 0.0
    %145 = vmatpush1.msra.mxu0 0.0
    %146 = vmatprep.subr.mxu0 0.0
    %147 = vmatpush1.msra.mxu0 0.0
    %148 = vmatprep.subr.mxu0 0.0
    %149 = vmatpush1.msra.mxu0 0.0
    %150 = vmatprep.subr.mxu0 0.0
    %151 = vmatpush1.msra.mxu0 0.0
    %152 = vmatprep.subr.mxu0 0.0
    %153 = vmatpush1.msra.mxu0 0.0
    %154 = vmatprep.subr.mxu0 0.0
    %155 = vmatpush1.msra.mxu0 0.0
    %156 = vmatprep.subr.mxu0 0.0
    %157 = vmatpush1.msra.mxu0 0.0
    %158 = vmatprep.subr.mxu0 0.0
    %159 = vmatpush1.msra.mxu0 0.0
    %160 = vmatprep.subr.mxu0 0.0
    %v161 = vand.u32 %v47, 4294901760
    %v162 = vsub.f32 %v47, %v161
    %v163 = vand.u32 %v162, 4294901760
    %v164 = vsub.f32 %v162, %v163
    %v165 = vand.u32 %v164, 4294901760
    %166 = vmatpush1.msra.mxu0 %v165
    %167 = vmatprep.subr.mxu0 0.0
    %v168 = vand.u32 %v46, 4294901760
    %v169 = vsub.f32 %v46, %v168
    %v170 = vand.u32 %v169, 4294901760
    %v171 = vsub.f32 %v169, %v170
    %v172 = vand.u32 %v171, 4294901760
    %173 = vmatpush1.msra.mxu0 %v172
    %174 = vmatprep.subr.mxu0 0.0
    %v175 = vand.u32 %v45, 4294901760
    %v176 = vsub.f32 %v45, %v175
    %v177 = vand.u32 %v176, 4294901760
    %v178 = vsub.f32 %v176, %v177
    %v179 = vand.u32 %v178, 4294901760
    %180 = vmatpush1.msra.mxu0 %v179
    %181 = vmatprep.subr.mxu0 0.0
    %v182 = vand.u32 %v44, 4294901760
    %v183 = vsub.f32 %v44, %v182
    %v184 = vand.u32 %v183, 4294901760
    %v185 = vsub.f32 %v183, %v184
    %v186 = vand.u32 %v185, 4294901760
    %187 = vmatpush1.msra.mxu0 %v186
    %188 = vmatprep.subr.mxu0 0.0
    %v189 = vand.u32 %v43, 4294901760
    %v190 = vsub.f32 %v43, %v189
    %v191 = vand.u32 %v190, 4294901760
    %v192 = vsub.f32 %v190, %v191
    %v193 = vand.u32 %v192, 4294901760
    %194 = vmatpush1.msra.mxu0 %v193
    %195 = vmatprep.subr.mxu0 0.0
    %v196 = vand.u32 %v42, 4294901760
    %v197 = vsub.f32 %v42, %v196
    %v198 = vand.u32 %v197, 4294901760
    %v199 = vsub.f32 %v197, %v198
    %v200 = vand.u32 %v199, 4294901760
    %201 = vmatpush1.msra.mxu0 %v200
    %202 = vmatprep.subr.mxu0 0.0
    %203 = vmatpush2.msra.mxu0 0.0
    %204 = vmatprep.subr.mxu0 0.0
    %205 = vmatpush2.msra.mxu0 0.0
    %206 = vmatprep.subr.mxu0 0.0
    %207 = vmatpush2.msra.mxu0 0.0
    %208 = vmatprep.subr.mxu0 0.0
    %209 = vmatpush2.msra.mxu0 0.0
    %210 = vmatprep.subr.mxu0 0.0
    %211 = vmatpush2.msra.mxu0 0.0
    %212 = vmatprep.subr.mxu0 0.0
    %213 = vmatpush2.msra.mxu0 0.0
    %214 = vmatprep.subr.mxu0 0.0
    %215 = vmatpush2.msra.mxu0 0.0
    %216 = vmatprep.subr.mxu0 0.0
    %217 = vmatpush2.msra.mxu0 0.0
    %218 = vmatprep.subr.mxu0 0.0
    %219 = vmatpush2.msra.mxu0 0.0
    %220 = vmatprep.subr.mxu0 0.0
    %221 = vmatpush2.msra.mxu0 0.0
    %222 = vmatprep.subr.mxu0 0.0
    %223 = vmatpush2.msra.mxu0 0.0
    %224 = vmatprep.subr.mxu0 0.0
    %225 = vmatpush2.msra.mxu0 0.0
    %226 = vmatprep.subr.mxu0 0.0
    %227 = vmatpush2.msra.mxu0 0.0
    %228 = vmatprep.subr.mxu0 0.0
    %229 = vmatpush2.msra.mxu0 0.0
    %230 = vmatprep.subr.mxu0 0.0
    %231 = vmatpush2.msra.mxu0 0.0
    %232 = vmatprep.subr.mxu0 0.0
    %233 = vmatpush2.msra.mxu0 0.0
    %234 = vmatprep.mubr.f32.mxu0 0.0
    %v235 = vand.u32 %v57, 4294901760
    %236 = vmatmul.mubr.f32.gmra.mxu0 %v235
    %v237 = vpop.f32.mrf.mxu0
    %v238 = vadd.f32 %v137, %v237
    %v239 = vpop.f32.mrf.mxu0
    %240 = vdwg.mxu0
    %241 = vmatprep.subr.mxu0 0.0
    %242 = vmatpush1.msra.mxu0 0.0
    %243 = vmatprep.subr.mxu0 0.0
    %244 = vmatpush1.msra.mxu0 0.0
    %245 = vmatprep.subr.mxu0 0.0
    %246 = vmatpush1.msra.mxu0 0.0
    %247 = vmatprep.subr.mxu0 0.0
    %248 = vmatpush1.msra.mxu0 0.0
    %249 = vmatprep.subr.mxu0 0.0
    %250 = vmatpush1.msra.mxu0 0.0
    %251 = vmatprep.subr.mxu0 0.0
    %252 = vmatpush1.msra.mxu0 0.0
    %253 = vmatprep.subr.mxu0 0.0
    %254 = vmatpush1.msra.mxu0 0.0
    %255 = vmatprep.subr.mxu0 0.0
    %256 = vmatpush1.msra.mxu0 0.0
    %257 = vmatprep.subr.mxu0 0.0
    %258 = vmatpush1.msra.mxu0 0.0
    %259 = vmatprep.subr.mxu0 0.0
    %260 = vmatpush1.msra.mxu0 0.0
    %261 = vmatprep.subr.mxu0 0.0
    %v262 = vand.u32 %v47, 4294901760
    %v263 = vsub.f32 %v47, %v262
    %264 = vmatpush1.msra.mxu0 %v263
    %265 = vmatprep.subr.mxu0 0.0
    %v266 = vand.u32 %v46, 4294901760
    %v267 = vsub.f32 %v46, %v266
    %268 = vmatpush1.msra.mxu0 %v267
    %269 = vmatprep.subr.mxu0 0.0
    %v270 = vand.u32 %v45, 4294901760
    %v271 = vsub.f32 %v45, %v270
    %272 = vmatpush1.msra.mxu0 %v271
    %273 = vmatprep.subr.mxu0 0.0
    %v274 = vand.u32 %v44, 4294901760
    %v275 = vsub.f32 %v44, %v274
    %276 = vmatpush1.msra.mxu0 %v275
    %277 = vmatprep.subr.mxu0 0.0
    %v278 = vand.u32 %v43, 4294901760
    %v279 = vsub.f32 %v43, %v278
    %280 = vmatpush1.msra.mxu0 %v279
    %281 = vmatprep.subr.mxu0 0.0
    %v282 = vand.u32 %v42, 4294901760
    %v283 = vsub.f32 %v42, %v282
    %284 = vmatpush1.msra.mxu0 %v283
    %285 = vmatprep.subr.mxu0 0.0
    %286 = vmatpush2.msra.mxu0 0.0
    %287 = vmatprep.subr.mxu0 0.0
    %288 = vmatpush2.msra.mxu0 0.0
    %289 = vmatprep.subr.mxu0 0.0
    %290 = vmatpush2.msra.mxu0 0.0
    %291 = vmatprep.subr.mxu0 0.0
    %292 = vmatpush2.msra.mxu0 0.0
    %293 = vmatprep.subr.mxu0 0.0
    %294 = vmatpush2.msra.mxu0 0.0
    %295 = vmatprep.subr.mxu0 0.0
    %296 = vmatpush2.msra.mxu0 0.0
    %297 = vmatprep.subr.mxu0 0.0
    %298 = vmatpush2.msra.mxu0 0.0
    %299 = vmatprep.subr.mxu0 0.0
    %300 = vmatpush2.msra.mxu0 0.0
    %301 = vmatprep.subr.mxu0 0.0
    %302 = vmatpush2.msra.mxu0 0.0
    %303 = vmatprep.subr.mxu0 0.0
    %304 = vmatpush2.msra.mxu0 0.0
    %305 = vmatprep.subr.mxu0 0.0
    %306 = vmatpush2.msra.mxu0 0.0
    %307 = vmatprep.subr.mxu0 0.0
    %308 = vmatpush2.msra.mxu0 0.0
    %309 = vmatprep.subr.mxu0 0.0
    %310 = vmatpush2.msra.mxu0 0.0
    %311 = vmatprep.subr.mxu0 0.0
    %312 = vmatpush2.msra.mxu0 0.0
    %313 = vmatprep.subr.mxu0 0.0
    %314 = vmatpush2.msra.mxu0 0.0
    %315 = vmatprep.subr.mxu0 0.0
    %316 = vmatpush2.msra.mxu0 0.0
    %317 = vmatprep.mubr.f32.mxu0 0.0
    %v318 = vand.u32 %v57, 4294901760
    %v319 = vsub.f32 %v57, %v318
    %320 = vmatmul.mubr.f32.gmra.mxu0 %v319
    %v321 = vpop.f32.mrf.mxu0
    %v322 = vadd.f32 %v238, %v321
    %v323 = vpop.f32.mrf.mxu0
    %324 = vdwg.mxu0
    %325 = vmatprep.subr.mxu0 0.0
    %326 = vmatpush1.msra.mxu0 0.0
    %327 = vmatprep.subr.mxu0 0.0
    %328 = vmatpush1.msra.mxu0 0.0
    %329 = vmatprep.subr.mxu0 0.0
    %330 = vmatpush1.msra.mxu0 0.0
    %331 = vmatprep.subr.mxu0 0.0
    %332 = vmatpush1.msra.mxu0 0.0
    %333 = vmatprep.subr.mxu0 0.0
    %334 = vmatpush1.msra.mxu0 0.0
    %335 = vmatprep.subr.mxu0 0.0
    %336 = vmatpush1.msra.mxu0 0.0
    %337 = vmatprep.subr.mxu0 0.0
    %338 = vmatpush1.msra.mxu0 0.0
    %339 = vmatprep.subr.mxu0 0.0
    %340 = vmatpush1.msra.mxu0 0.0
    %341 = vmatprep.subr.mxu0 0.0
    %342 = vmatpush1.msra.mxu0 0.0
    %343 = vmatprep.subr.mxu0 0.0
    %344 = vmatpush1.msra.mxu0 0.0
    %345 = vmatprep.subr.mxu0 0.0
    %v346 = vand.u32 %v47, 4294901760
    %347 = vmatpush1.msra.mxu0 %v346
    %348 = vmatprep.subr.mxu0 0.0
    %v349 = vand.u32 %v46, 4294901760
    %350 = vmatpush1.msra.mxu0 %v349
    %351 = vmatprep.subr.mxu0 0.0
    %v352 = vand.u32 %v45, 4294901760
    %353 = vmatpush1.msra.mxu0 %v352
    %354 = vmatprep.subr.mxu0 0.0
    %v355 = vand.u32 %v44, 4294901760
    %356 = vmatpush1.msra.mxu0 %v355
    %357 = vmatprep.subr.mxu0 0.0
    %v358 = vand.u32 %v43, 4294901760
    %359 = vmatpush1.msra.mxu0 %v358
    %360 = vmatprep.subr.mxu0 0.0
    %v361 = vand.u32 %v42, 4294901760
    %362 = vmatpush1.msra.mxu0 %v361
    %363 = vmatprep.subr.mxu0 0.0
    %364 = vmatpush2.msra.mxu0 0.0
    %365 = vmatprep.subr.mxu0 0.0
    %366 = vmatpush2.msra.mxu0 0.0
    %367 = vmatprep.subr.mxu0 0.0
    %368 = vmatpush2.msra.mxu0 0.0
    %369 = vmatprep.subr.mxu0 0.0
    %370 = vmatpush2.msra.mxu0 0.0
    %371 = vmatprep.subr.mxu0 0.0
    %372 = vmatpush2.msra.mxu0 0.0
    %373 = vmatprep.subr.mxu0 0.0
    %374 = vmatpush2.msra.mxu0 0.0
    %375 = vmatprep.subr.mxu0 0.0
    %376 = vmatpush2.msra.mxu0 0.0
    %377 = vmatprep.subr.mxu0 0.0
    %378 = vmatpush2.msra.mxu0 0.0
    %379 = vmatprep.subr.mxu0 0.0
    %380 = vmatpush2.msra.mxu0 0.0
    %381 = vmatprep.subr.mxu0 0.0
    %382 = vmatpush2.msra.mxu0 0.0
    %383 = vmatprep.subr.mxu0 0.0
    %384 = vmatpush2.msra.mxu0 0.0
    %385 = vmatprep.subr.mxu0 0.0
    %386 = vmatpush2.msra.mxu0 0.0
    %387 = vmatprep.subr.mxu0 0.0
    %388 = vmatpush2.msra.mxu0 0.0
    %389 = vmatprep.subr.mxu0 0.0
    %390 = vmatpush2.msra.mxu0 0.0
    %391 = vmatprep.subr.mxu0 0.0
    %392 = vmatpush2.msra.mxu0 0.0
    %393 = vmatprep.subr.mxu0 0.0
    %394 = vmatpush2.msra.mxu0 0.0
    %395 = vmatprep.mubr.f32.mxu0 0.0
    %v396 = vand.u32 %v57, 4294901760
    %v397 = vsub.f32 %v57, %v396
    %v398 = vand.u32 %v397, 4294901760
    %399 = vmatmul.mubr.f32.gmra.mxu0 %v398
    %v400 = vpop.f32.mrf.mxu0
    %v401 = vadd.f32 %v322, %v400
    %v402 = vpop.f32.mrf.mxu0
    %403 = vdwg.mxu0
    %404 = vmatprep.subr.mxu0 0.0
    %405 = vmatpush1.msra.mxu0 0.0
    %406 = vmatprep.subr.mxu0 0.0
    %407 = vmatpush1.msra.mxu0 0.0
    %408 = vmatprep.subr.mxu0 0.0
    %409 = vmatpush1.msra.mxu0 0.0
    %410 = vmatprep.subr.mxu0 0.0
    %411 = vmatpush1.msra.mxu0 0.0
    %412 = vmatprep.subr.mxu0 0.0
    %413 = vmatpush1.msra.mxu0 0.0
    %414 = vmatprep.subr.mxu0 0.0
    %415 = vmatpush1.msra.mxu0 0.0
    %416 = vmatprep.subr.mxu0 0.0
    %417 = vmatpush1.msra.mxu0 0.0
    %418 = vmatprep.subr.mxu0 0.0
    %419 = vmatpush1.msra.mxu0 0.0
    %420 = vmatprep.subr.mxu0 0.0
    %421 = vmatpush1.msra.mxu0 0.0
    %422 = vmatprep.subr.mxu0 0.0
    %423 = vmatpush1.msra.mxu0 0.0
    %424 = vmatprep.subr.mxu0 0.0
    %v425 = vand.u32 %v47, 4294901760
    %v426 = vsub.f32 %v47, %v425
    %v427 = vand.u32 %v426, 4294901760
    %428 = vmatpush1.msra.mxu0 %v427
    %429 = vmatprep.subr.mxu0 0.0
    %v430 = vand.u32 %v46, 4294901760
    %v431 = vsub.f32 %v46, %v430
    %v432 = vand.u32 %v431, 4294901760
    %433 = vmatpush1.msra.mxu0 %v432
    %434 = vmatprep.subr.mxu0 0.0
    %v435 = vand.u32 %v45, 4294901760
    %v436 = vsub.f32 %v45, %v435
    %v437 = vand.u32 %v436, 4294901760
    %438 = vmatpush1.msra.mxu0 %v437
    %439 = vmatprep.subr.mxu0 0.0
    %v440 = vand.u32 %v44, 4294901760
    %v441 = vsub.f32 %v44, %v440
    %v442 = vand.u32 %v441, 4294901760
    %443 = vmatpush1.msra.mxu0 %v442
    %444 = vmatprep.subr.mxu0 0.0
    %v445 = vand.u32 %v43, 4294901760
    %v446 = vsub.f32 %v43, %v445
    %v447 = vand.u32 %v446, 4294901760
    %448 = vmatpush1.msra.mxu0 %v447
    %449 = vmatprep.subr.mxu0 0.0
    %v450 = vand.u32 %v42, 4294901760
    %v451 = vsub.f32 %v42, %v450
    %v452 = vand.u32 %v451, 4294901760
    %453 = vmatpush1.msra.mxu0 %v452
    %454 = vmatprep.subr.mxu0 0.0
    %455 = vmatpush2.msra.mxu0 0.0
    %456 = vmatprep.subr.mxu0 0.0
    %457 = vmatpush2.msra.mxu0 0.0
    %458 = vmatprep.subr.mxu0 0.0
    %459 = vmatpush2.msra.mxu0 0.0
    %460 = vmatprep.subr.mxu0 0.0
    %461 = vmatpush2.msra.mxu0 0.0
    %462 = vmatprep.subr.mxu0 0.0
    %463 = vmatpush2.msra.mxu0 0.0
    %464 = vmatprep.subr.mxu0 0.0
    %465 = vmatpush2.msra.mxu0 0.0
    %466 = vmatprep.subr.mxu0 0.0
    %467 = vmatpush2.msra.mxu0 0.0
    %468 = vmatprep.subr.mxu0 0.0
    %469 = vmatpush2.msra.mxu0 0.0
    %470 = vmatprep.subr.mxu0 0.0
    %471 = vmatpush2.msra.mxu0 0.0
    %472 = vmatprep.subr.mxu0 0.0
    %473 = vmatpush2.msra.mxu0 0.0
    %474 = vmatprep.subr.mxu0 0.0
    %475 = vmatpush2.msra.mxu0 0.0
    %476 = vmatprep.subr.mxu0 0.0
    %477 = vmatpush2.msra.mxu0 0.0
    %478 = vmatprep.subr.mxu0 0.0
    %479 = vmatpush2.msra.mxu0 0.0
    %480 = vmatprep.subr.mxu0 0.0
    %481 = vmatpush2.msra.mxu0 0.0
    %482 = vmatprep.subr.mxu0 0.0
    %483 = vmatpush2.msra.mxu0 0.0
    %484 = vmatprep.subr.mxu0 0.0
    %485 = vmatpush2.msra.mxu0 0.0
    %486 = vmatprep.mubr.f32.mxu0 0.0
    %v487 = vand.u32 %v57, 4294901760
    %488 = vmatmul.mubr.f32.gmra.mxu0 %v487
    %v489 = vpop.f32.mrf.mxu0
    %v490 = vadd.f32 %v401, %v489
    %v491 = vpop.f32.mrf.mxu0
    %492 = vdwg.mxu0
    %493 = vmatprep.subr.mxu0 0.0
    %494 = vmatpush1.msra.mxu0 0.0
    %495 = vmatprep.subr.mxu0 0.0
    %496 = vmatpush1.msra.mxu0 0.0
    %497 = vmatprep.subr.mxu0 0.0
    %498 = vmatpush1.msra.mxu0 0.0
    %499 = vmatprep.subr.mxu0 0.0
    %500 = vmatpush1.msra.mxu0 0.0
    %501 = vmatprep.subr.mxu0 0.0
    %502 = vmatpush1.msra.mxu0 0.0
    %503 = vmatprep.subr.mxu0 0.0
    %504 = vmatpush1.msra.mxu0 0.0
    %505 = vmatprep.subr.mxu0 0.0
    %506 = vmatpush1.msra.mxu0 0.0
    %507 = vmatprep.subr.mxu0 0.0
    %508 = vmatpush1.msra.mxu0 0.0
    %509 = vmatprep.subr.mxu0 0.0
    %510 = vmatpush1.msra.mxu0 0.0
    %511 = vmatprep.subr.mxu0 0.0
    %512 = vmatpush1.msra.mxu0 0.0
    %513 = vmatprep.subr.mxu0 0.0
    %v514 = vand.u32 %v47, 4294901760
    %515 = vmatpush1.msra.mxu0 %v514
    %516 = vmatprep.subr.mxu0 0.0
    %v517 = vand.u32 %v46, 4294901760
    %518 = vmatpush1.msra.mxu0 %v517
    %519 = vmatprep.subr.mxu0 0.0
    %v520 = vand.u32 %v45, 4294901760
    %521 = vmatpush1.msra.mxu0 %v520
    %522 = vmatprep.subr.mxu0 0.0
    %v523 = vand.u32 %v44, 4294901760
    %524 = vmatpush1.msra.mxu0 %v523
    %525 = vmatprep.subr.mxu0 0.0
    %v526 = vand.u32 %v43, 4294901760
    %527 = vmatpush1.msra.mxu0 %v526
    %528 = vmatprep.subr.mxu0 0.0
    %v529 = vand.u32 %v42, 4294901760
    %530 = vmatpush1.msra.mxu0 %v529
    %531 = vmatprep.subr.mxu0 0.0
    %532 = vmatpush2.msra.mxu0 0.0
    %533 = vmatprep.subr.mxu0 0.0
    %534 = vmatpush2.msra.mxu0 0.0
    %535 = vmatprep.subr.mxu0 0.0
    %536 = vmatpush2.msra.mxu0 0.0
    %537 = vmatprep.subr.mxu0 0.0
    %538 = vmatpush2.msra.mxu0 0.0
    %539 = vmatprep.subr.mxu0 0.0
    %540 = vmatpush2.msra.mxu0 0.0
    %541 = vmatprep.subr.mxu0 0.0
    %542 = vmatpush2.msra.mxu0 0.0
    %543 = vmatprep.subr.mxu0 0.0
    %544 = vmatpush2.msra.mxu0 0.0
    %545 = vmatprep.subr.mxu0 0.0
    %546 = vmatpush2.msra.mxu0 0.0
    %547 = vmatprep.subr.mxu0 0.0
    %548 = vmatpush2.msra.mxu0 0.0
    %549 = vmatprep.subr.mxu0 0.0
    %550 = vmatpush2.msra.mxu0 0.0
    %551 = vmatprep.subr.mxu0 0.0
    %552 = vmatpush2.msra.mxu0 0.0
    %553 = vmatprep.subr.mxu0 0.0
    %554 = vmatpush2.msra.mxu0 0.0
    %555 = vmatprep.subr.mxu0 0.0
    %556 = vmatpush2.msra.mxu0 0.0
    %557 = vmatprep.subr.mxu0 0.0
    %558 = vmatpush2.msra.mxu0 0.0
    %559 = vmatprep.subr.mxu0 0.0
    %560 = vmatpush2.msra.mxu0 0.0
    %561 = vmatprep.subr.mxu0 0.0
    %562 = vmatpush2.msra.mxu0 0.0
    %563 = vmatprep.mubr.f32.mxu0 0.0
    %v564 = vand.u32 %v57, 4294901760
    %565 = vmatmul.mubr.f32.gmra.mxu0 %v564
    %v566 = vpop.f32.mrf.mxu0
    %v567 = vadd.f32 %v490, %v566
    %v568 = vpop.f32.mrf.mxu0
    %569 = vdwg.mxu0
    %571 = vrot.lane.b32.xlu0 %v567, 96
    %v572 = vpop.permute.xlu0 %571
    %vm573 = vcmask 261120
    %v574 = vsel %vm573, %v567, 0
    %v576 = vsel %vm573, %v572, 0
    %578 = vmatprep.subr.mxu0 0.0
    %579 = vmatpush1.xpose.msra.mxu0 0.0
    %580 = vmatprep.subr.mxu0 0.0
    %581 = vmatpush1.xpose.msra.mxu0 0.0
    %582 = vmatprep.subr.mxu0 0.0
    %583 = vmatpush1.xpose.msra.mxu0 0.0
    %584 = vmatprep.subr.mxu0 0.0
    %585 = vmatpush1.xpose.msra.mxu0 0.0
    %586 = vmatprep.subr.mxu0 0.0
    %587 = vmatpush1.xpose.msra.mxu0 0.0
    %588 = vmatprep.subr.mxu0 0.0
    %589 = vmatpush1.xpose.msra.mxu0 0.0
    %590 = vmatprep.subr.mxu0 0.0
    %591 = vmatpush1.xpose.msra.mxu0 0.0
    %592 = vmatprep.subr.mxu0 0.0
    %593 = vmatpush1.xpose.msra.mxu0 0.0
    %594 = vmatprep.subr.mxu0 0.0
    %595 = vmatpush1.xpose.msra.mxu0 0.0
    %596 = vmatprep.subr.mxu0 0.0
    %597 = vmatpush1.xpose.msra.mxu0 0.0
    %598 = vmatprep.subr.mxu0 0.0
    %599 = vmatpush1.xpose.msra.mxu0 0.0
    %600 = vmatprep.subr.mxu0 0.0
    %601 = vmatpush1.xpose.msra.mxu0 0.0
    %602 = vmatprep.subr.mxu0 0.0
    %603 = vmatpush1.xpose.msra.mxu0 0.0
    %604 = vmatprep.subr.mxu0 0.0
    %605 = vmatpush1.xpose.msra.mxu0 0.0
    %606 = vmatprep.subr.mxu0 0.0
    %607 = vmatpush1.xpose.msra.mxu0 0.0
    %608 = vmatprep.subr.mxu0 0.0
    %v609 = vand.u32 %v576, 4294901760
    %610 = vmatpush1.xpose.msra.mxu0 %v609
    %611 = vmatprep.subr.mxu0 0.0
    %612 = vmatpush2.xpose.msra.mxu0 0.0
    %613 = vmatprep.subr.mxu0 0.0
    %614 = vmatpush2.xpose.msra.mxu0 0.0
    %615 = vmatprep.subr.mxu0 0.0
    %616 = vmatpush2.xpose.msra.mxu0 0.0
    %617 = vmatprep.subr.mxu0 0.0
    %618 = vmatpush2.xpose.msra.mxu0 0.0
    %619 = vmatprep.subr.mxu0 0.0
    %620 = vmatpush2.xpose.msra.mxu0 0.0
    %621 = vmatprep.subr.mxu0 0.0
    %622 = vmatpush2.xpose.msra.mxu0 0.0
    %623 = vmatprep.subr.mxu0 0.0
    %624 = vmatpush2.xpose.msra.mxu0 0.0
    %625 = vmatprep.subr.mxu0 0.0
    %626 = vmatpush2.xpose.msra.mxu0 0.0
    %627 = vmatprep.subr.mxu0 0.0
    %628 = vmatpush2.xpose.msra.mxu0 0.0
    %629 = vmatprep.subr.mxu0 0.0
    %630 = vmatpush2.xpose.msra.mxu0 0.0
    %631 = vmatprep.subr.mxu0 0.0
    %632 = vmatpush2.xpose.msra.mxu0 0.0
    %633 = vmatprep.subr.mxu0 0.0
    %634 = vmatpush2.xpose.msra.mxu0 0.0
    %635 = vmatprep.subr.mxu0 0.0
    %636 = vmatpush2.xpose.msra.mxu0 0.0
    %637 = vmatprep.subr.mxu0 0.0
    %638 = vmatpush2.xpose.msra.mxu0 0.0
    %639 = vmatprep.subr.mxu0 0.0
    %640 = vmatpush2.xpose.msra.mxu0 0.0
    %641 = vmatprep.subr.mxu0 0.0
    %642 = vmatpush2.xpose.msra.mxu0 0.0
    %643 = vmatprep.mubr.f32.mxu0 0.0
    %v644 = vand.u32 %v574, 4294901760
    %v645 = vsub.f32 %v574, %v644
    %v646 = vand.u32 %v645, 4294901760
    %v647 = vsub.f32 %v645, %v646
    %v648 = vand.u32 %v647, 4294901760
    %649 = vmatmul.mubr.f32.gmra.mxu0 %v648
    %v650 = vpop.f32.mrf.mxu0
    %v651 = vadd.f32 0.0, %v650
    %v652 = vpop.f32.mrf.mxu0
    %653 = vdwg.mxu0
    %654 = vmatprep.subr.mxu0 0.0
    %655 = vmatpush1.xpose.msra.mxu0 0.0
    %656 = vmatprep.subr.mxu0 0.0
    %657 = vmatpush1.xpose.msra.mxu0 0.0
    %658 = vmatprep.subr.mxu0 0.0
    %659 = vmatpush1.xpose.msra.mxu0 0.0
    %660 = vmatprep.subr.mxu0 0.0
    %661 = vmatpush1.xpose.msra.mxu0 0.0
    %662 = vmatprep.subr.mxu0 0.0
    %663 = vmatpush1.xpose.msra.mxu0 0.0
    %664 = vmatprep.subr.mxu0 0.0
    %665 = vmatpush1.xpose.msra.mxu0 0.0
    %666 = vmatprep.subr.mxu0 0.0
    %667 = vmatpush1.xpose.msra.mxu0 0.0
    %668 = vmatprep.subr.mxu0 0.0
    %669 = vmatpush1.xpose.msra.mxu0 0.0
    %670 = vmatprep.subr.mxu0 0.0
    %671 = vmatpush1.xpose.msra.mxu0 0.0
    %672 = vmatprep.subr.mxu0 0.0
    %673 = vmatpush1.xpose.msra.mxu0 0.0
    %674 = vmatprep.subr.mxu0 0.0
    %675 = vmatpush1.xpose.msra.mxu0 0.0
    %676 = vmatprep.subr.mxu0 0.0
    %677 = vmatpush1.xpose.msra.mxu0 0.0
    %678 = vmatprep.subr.mxu0 0.0
    %679 = vmatpush1.xpose.msra.mxu0 0.0
    %680 = vmatprep.subr.mxu0 0.0
    %681 = vmatpush1.xpose.msra.mxu0 0.0
    %682 = vmatprep.subr.mxu0 0.0
    %683 = vmatpush1.xpose.msra.mxu0 0.0
    %684 = vmatprep.subr.mxu0 0.0
    %v685 = vand.u32 %v576, 4294901760
    %v686 = vsub.f32 %v576, %v685
    %v687 = vand.u32 %v686, 4294901760
    %v688 = vsub.f32 %v686, %v687
    %v689 = vand.u32 %v688, 4294901760
    %690 = vmatpush1.xpose.msra.mxu0 %v689
    %691 = vmatprep.subr.mxu0 0.0
    %692 = vmatpush2.xpose.msra.mxu0 0.0
    %693 = vmatprep.subr.mxu0 0.0
    %694 = vmatpush2.xpose.msra.mxu0 0.0
    %695 = vmatprep.subr.mxu0 0.0
    %696 = vmatpush2.xpose.msra.mxu0 0.0
    %697 = vmatprep.subr.mxu0 0.0
    %698 = vmatpush2.xpose.msra.mxu0 0.0
    %699 = vmatprep.subr.mxu0 0.0
    %700 = vmatpush2.xpose.msra.mxu0 0.0
    %701 = vmatprep.subr.mxu0 0.0
    %702 = vmatpush2.xpose.msra.mxu0 0.0
    %703 = vmatprep.subr.mxu0 0.0
    %704 = vmatpush2.xpose.msra.mxu0 0.0
    %705 = vmatprep.subr.mxu0 0.0
    %706 = vmatpush2.xpose.msra.mxu0 0.0
    %707 = vmatprep.subr.mxu0 0.0
    %708 = vmatpush2.xpose.msra.mxu0 0.0
    %709 = vmatprep.subr.mxu0 0.0
    %710 = vmatpush2.xpose.msra.mxu0 0.0
    %711 = vmatprep.subr.mxu0 0.0
    %712 = vmatpush2.xpose.msra.mxu0 0.0
    %713 = vmatprep.subr.mxu0 0.0
    %714 = vmatpush2.xpose.msra.mxu0 0.0
    %715 = vmatprep.subr.mxu0 0.0
    %716 = vmatpush2.xpose.msra.mxu0 0.0
    %717 = vmatprep.subr.mxu0 0.0
    %718 = vmatpush2.xpose.msra.mxu0 0.0
    %719 = vmatprep.subr.mxu0 0.0
    %720 = vmatpush2.xpose.msra.mxu0 0.0
    %721 = vmatprep.subr.mxu0 0.0
    %722 = vmatpush2.xpose.msra.mxu0 0.0
    %723 = vmatprep.mubr.f32.mxu0 0.0
    %v724 = vand.u32 %v574, 4294901760
    %725 = vmatmul.mubr.f32.gmra.mxu0 %v724
    %v726 = vpop.f32.mrf.mxu0
    %v727 = vadd.f32 %v651, %v726
    %v728 = vpop.f32.mrf.mxu0
    %729 = vdwg.mxu0
    %730 = vmatprep.subr.mxu0 0.0
    %731 = vmatpush1.xpose.msra.mxu0 0.0
    %732 = vmatprep.subr.mxu0 0.0
    %733 = vmatpush1.xpose.msra.mxu0 0.0
    %734 = vmatprep.subr.mxu0 0.0
    %735 = vmatpush1.xpose.msra.mxu0 0.0
    %736 = vmatprep.subr.mxu0 0.0
    %737 = vmatpush1.xpose.msra.mxu0 0.0
    %738 = vmatprep.subr.mxu0 0.0
    %739 = vmatpush1.xpose.msra.mxu0 0.0
    %740 = vmatprep.subr.mxu0 0.0
    %741 = vmatpush1.xpose.msra.mxu0 0.0
    %742 = vmatprep.subr.mxu0 0.0
    %743 = vmatpush1.xpose.msra.mxu0 0.0
    %744 = vmatprep.subr.mxu0 0.0
    %745 = vmatpush1.xpose.msra.mxu0 0.0
    %746 = vmatprep.subr.mxu0 0.0
    %747 = vmatpush1.xpose.msra.mxu0 0.0
    %748 = vmatprep.subr.mxu0 0.0
    %749 = vmatpush1.xpose.msra.mxu0 0.0
    %750 = vmatprep.subr.mxu0 0.0
    %751 = vmatpush1.xpose.msra.mxu0 0.0
    %752 = vmatprep.subr.mxu0 0.0
    %753 = vmatpush1.xpose.msra.mxu0 0.0
    %754 = vmatprep.subr.mxu0 0.0
    %755 = vmatpush1.xpose.msra.mxu0 0.0
    %756 = vmatprep.subr.mxu0 0.0
    %757 = vmatpush1.xpose.msra.mxu0 0.0
    %758 = vmatprep.subr.mxu0 0.0
    %759 = vmatpush1.xpose.msra.mxu0 0.0
    %760 = vmatprep.subr.mxu0 0.0
    %v761 = vand.u32 %v576, 4294901760
    %v762 = vsub.f32 %v576, %v761
    %763 = vmatpush1.xpose.msra.mxu0 %v762
    %764 = vmatprep.subr.mxu0 0.0
    %765 = vmatpush2.xpose.msra.mxu0 0.0
    %766 = vmatprep.subr.mxu0 0.0
    %767 = vmatpush2.xpose.msra.mxu0 0.0
    %768 = vmatprep.subr.mxu0 0.0
    %769 = vmatpush2.xpose.msra.mxu0 0.0
    %770 = vmatprep.subr.mxu0 0.0
    %771 = vmatpush2.xpose.msra.mxu0 0.0
    %772 = vmatprep.subr.mxu0 0.0
    %773 = vmatpush2.xpose.msra.mxu0 0.0
    %774 = vmatprep.subr.mxu0 0.0
    %775 = vmatpush2.xpose.msra.mxu0 0.0
    %776 = vmatprep.subr.mxu0 0.0
    %777 = vmatpush2.xpose.msra.mxu0 0.0
    %778 = vmatprep.subr.mxu0 0.0
    %779 = vmatpush2.xpose.msra.mxu0 0.0
    %780 = vmatprep.subr.mxu0 0.0
    %781 = vmatpush2.xpose.msra.mxu0 0.0
    %782 = vmatprep.subr.mxu0 0.0
    %783 = vmatpush2.xpose.msra.mxu0 0.0
    %784 = vmatprep.subr.mxu0 0.0
    %785 = vmatpush2.xpose.msra.mxu0 0.0
    %786 = vmatprep.subr.mxu0 0.0
    %787 = vmatpush2.xpose.msra.mxu0 0.0
    %788 = vmatprep.subr.mxu0 0.0
    %789 = vmatpush2.xpose.msra.mxu0 0.0
    %790 = vmatprep.subr.mxu0 0.0
    %791 = vmatpush2.xpose.msra.mxu0 0.0
    %792 = vmatprep.subr.mxu0 0.0
    %793 = vmatpush2.xpose.msra.mxu0 0.0
    %794 = vmatprep.subr.mxu0 0.0
    %795 = vmatpush2.xpose.msra.mxu0 0.0
    %796 = vmatprep.mubr.f32.mxu0 0.0
    %v797 = vand.u32 %v574, 4294901760
    %v798 = vsub.f32 %v574, %v797
    %799 = vmatmul.mubr.f32.gmra.mxu0 %v798
    %v800 = vpop.f32.mrf.mxu0
    %v801 = vadd.f32 %v727, %v800
    %v802 = vpop.f32.mrf.mxu0
    %803 = vdwg.mxu0
    %804 = vmatprep.subr.mxu0 0.0
    %805 = vmatpush1.xpose.msra.mxu0 0.0
    %806 = vmatprep.subr.mxu0 0.0
    %807 = vmatpush1.xpose.msra.mxu0 0.0
    %808 = vmatprep.subr.mxu0 0.0
    %809 = vmatpush1.xpose.msra.mxu0 0.0
    %810 = vmatprep.subr.mxu0 0.0
    %811 = vmatpush1.xpose.msra.mxu0 0.0
    %812 = vmatprep.subr.mxu0 0.0
    %813 = vmatpush1.xpose.msra.mxu0 0.0
    %814 = vmatprep.subr.mxu0 0.0
    %815 = vmatpush1.xpose.msra.mxu0 0.0
    %816 = vmatprep.subr.mxu0 0.0
    %817 = vmatpush1.xpose.msra.mxu0 0.0
    %818 = vmatprep.subr.mxu0 0.0
    %819 = vmatpush1.xpose.msra.mxu0 0.0
    %820 = vmatprep.subr.mxu0 0.0
    %821 = vmatpush1.xpose.msra.mxu0 0.0
    %822 = vmatprep.subr.mxu0 0.0
    %823 = vmatpush1.xpose.msra.mxu0 0.0
    %824 = vmatprep.subr.mxu0 0.0
    %825 = vmatpush1.xpose.msra.mxu0 0.0
    %826 = vmatprep.subr.mxu0 0.0
    %827 = vmatpush1.xpose.msra.mxu0 0.0
    %828 = vmatprep.subr.mxu0 0.0
    %829 = vmatpush1.xpose.msra.mxu0 0.0
    %830 = vmatprep.subr.mxu0 0.0
    %831 = vmatpush1.xpose.msra.mxu0 0.0
    %832 = vmatprep.subr.mxu0 0.0
    %833 = vmatpush1.xpose.msra.mxu0 0.0
    %834 = vmatprep.subr.mxu0 0.0
    %v835 = vand.u32 %v576, 4294901760
    %836 = vmatpush1.xpose.msra.mxu0 %v835
    %837 = vmatprep.subr.mxu0 0.0
    %838 = vmatpush2.xpose.msra.mxu0 0.0
    %839 = vmatprep.subr.mxu0 0.0
    %840 = vmatpush2.xpose.msra.mxu0 0.0
    %841 = vmatprep.subr.mxu0 0.0
    %842 = vmatpush2.xpose.msra.mxu0 0.0
    %843 = vmatprep.subr.mxu0 0.0
    %844 = vmatpush2.xpose.msra.mxu0 0.0
    %845 = vmatprep.subr.mxu0 0.0
    %846 = vmatpush2.xpose.msra.mxu0 0.0
    %847 = vmatprep.subr.mxu0 0.0
    %848 = vmatpush2.xpose.msra.mxu0 0.0
    %849 = vmatprep.subr.mxu0 0.0
    %850 = vmatpush2.xpose.msra.mxu0 0.0
    %851 = vmatprep.subr.mxu0 0.0
    %852 = vmatpush2.xpose.msra.mxu0 0.0
    %853 = vmatprep.subr.mxu0 0.0
    %854 = vmatpush2.xpose.msra.mxu0 0.0
    %855 = vmatprep.subr.mxu0 0.0
    %856 = vmatpush2.xpose.msra.mxu0 0.0
    %857 = vmatprep.subr.mxu0 0.0
    %858 = vmatpush2.xpose.msra.mxu0 0.0
    %859 = vmatprep.subr.mxu0 0.0
    %860 = vmatpush2.xpose.msra.mxu0 0.0
    %861 = vmatprep.subr.mxu0 0.0
    %862 = vmatpush2.xpose.msra.mxu0 0.0
    %863 = vmatprep.subr.mxu0 0.0
    %864 = vmatpush2.xpose.msra.mxu0 0.0
    %865 = vmatprep.subr.mxu0 0.0
    %866 = vmatpush2.xpose.msra.mxu0 0.0
    %867 = vmatprep.subr.mxu0 0.0
    %868 = vmatpush2.xpose.msra.mxu0 0.0
    %869 = vmatprep.mubr.f32.mxu0 0.0
    %v870 = vand.u32 %v574, 4294901760
    %v871 = vsub.f32 %v574, %v870
    %v872 = vand.u32 %v871, 4294901760
    %873 = vmatmul.mubr.f32.gmra.mxu0 %v872
    %v874 = vpop.f32.mrf.mxu0
    %v875 = vadd.f32 %v801, %v874
    %v876 = vpop.f32.mrf.mxu0
    %877 = vdwg.mxu0
    %878 = vmatprep.subr.mxu0 0.0
    %879 = vmatpush1.xpose.msra.mxu0 0.0
    %880 = vmatprep.subr.mxu0 0.0
    %881 = vmatpush1.xpose.msra.mxu0 0.0
    %882 = vmatprep.subr.mxu0 0.0
    %883 = vmatpush1.xpose.msra.mxu0 0.0
    %884 = vmatprep.subr.mxu0 0.0
    %885 = vmatpush1.xpose.msra.mxu0 0.0
    %886 = vmatprep.subr.mxu0 0.0
    %887 = vmatpush1.xpose.msra.mxu0 0.0
    %888 = vmatprep.subr.mxu0 0.0
    %889 = vmatpush1.xpose.msra.mxu0 0.0
    %890 = vmatprep.subr.mxu0 0.0
    %891 = vmatpush1.xpose.msra.mxu0 0.0
    %892 = vmatprep.subr.mxu0 0.0
    %893 = vmatpush1.xpose.msra.mxu0 0.0
    %894 = vmatprep.subr.mxu0 0.0
    %895 = vmatpush1.xpose.msra.mxu0 0.0
    %896 = vmatprep.subr.mxu0 0.0
    %897 = vmatpush1.xpose.msra.mxu0 0.0
    %898 = vmatprep.subr.mxu0 0.0
    %899 = vmatpush1.xpose.msra.mxu0 0.0
    %900 = vmatprep.subr.mxu0 0.0
    %901 = vmatpush1.xpose.msra.mxu0 0.0
    %902 = vmatprep.subr.mxu0 0.0
    %903 = vmatpush1.xpose.msra.mxu0 0.0
    %904 = vmatprep.subr.mxu0 0.0
    %905 = vmatpush1.xpose.msra.mxu0 0.0
    %906 = vmatprep.subr.mxu0 0.0
    %907 = vmatpush1.xpose.msra.mxu0 0.0
    %908 = vmatprep.subr.mxu0 0.0
    %v909 = vand.u32 %v576, 4294901760
    %v910 = vsub.f32 %v576, %v909
    %v911 = vand.u32 %v910, 4294901760
    %912 = vmatpush1.xpose.msra.mxu0 %v911
    %913 = vmatprep.subr.mxu0 0.0
    %914 = vmatpush2.xpose.msra.mxu0 0.0
    %915 = vmatprep.subr.mxu0 0.0
    %916 = vmatpush2.xpose.msra.mxu0 0.0
    %917 = vmatprep.subr.mxu0 0.0
    %918 = vmatpush2.xpose.msra.mxu0 0.0
    %919 = vmatprep.subr.mxu0 0.0
    %920 = vmatpush2.xpose.msra.mxu0 0.0
    %921 = vmatprep.subr.mxu0 0.0
    %922 = vmatpush2.xpose.msra.mxu0 0.0
    %923 = vmatprep.subr.mxu0 0.0
    %924 = vmatpush2.xpose.msra.mxu0 0.0
    %925 = vmatprep.subr.mxu0 0.0
    %926 = vmatpush2.xpose.msra.mxu0 0.0
    %927 = vmatprep.subr.mxu0 0.0
    %928 = vmatpush2.xpose.msra.mxu0 0.0
    %929 = vmatprep.subr.mxu0 0.0
    %930 = vmatpush2.xpose.msra.mxu0 0.0
    %931 = vmatprep.subr.mxu0 0.0
    %932 = vmatpush2.xpose.msra.mxu0 0.0
    %933 = vmatprep.subr.mxu0 0.0
    %934 = vmatpush2.xpose.msra.mxu0 0.0
    %935 = vmatprep.subr.mxu0 0.0
    %936 = vmatpush2.xpose.msra.mxu0 0.0
    %937 = vmatprep.subr.mxu0 0.0
    %938 = vmatpush2.xpose.msra.mxu0 0.0
    %939 = vmatprep.subr.mxu0 0.0
    %940 = vmatpush2.xpose.msra.mxu0 0.0
    %941 = vmatprep.subr.mxu0 0.0
    %942 = vmatpush2.xpose.msra.mxu0 0.0
    %943 = vmatprep.subr.mxu0 0.0
    %944 = vmatpush2.xpose.msra.mxu0 0.0
    %945 = vmatprep.mubr.f32.mxu0 0.0
    %v946 = vand.u32 %v574, 4294901760
    %947 = vmatmul.mubr.f32.gmra.mxu0 %v946
    %v948 = vpop.f32.mrf.mxu0
    %v949 = vadd.f32 %v875, %v948
    %v950 = vpop.f32.mrf.mxu0
    %951 = vdwg.mxu0
    %952 = vmatprep.subr.mxu0 0.0
    %953 = vmatpush1.xpose.msra.mxu0 0.0
    %954 = vmatprep.subr.mxu0 0.0
    %955 = vmatpush1.xpose.msra.mxu0 0.0
    %956 = vmatprep.subr.mxu0 0.0
    %957 = vmatpush1.xpose.msra.mxu0 0.0
    %958 = vmatprep.subr.mxu0 0.0
    %959 = vmatpush1.xpose.msra.mxu0 0.0
    %960 = vmatprep.subr.mxu0 0.0
    %961 = vmatpush1.xpose.msra.mxu0 0.0
    %962 = vmatprep.subr.mxu0 0.0
    %963 = vmatpush1.xpose.msra.mxu0 0.0
    %964 = vmatprep.subr.mxu0 0.0
    %965 = vmatpush1.xpose.msra.mxu0 0.0
    %966 = vmatprep.subr.mxu0 0.0
    %967 = vmatpush1.xpose.msra.mxu0 0.0
    %968 = vmatprep.subr.mxu0 0.0
    %969 = vmatpush1.xpose.msra.mxu0 0.0
    %970 = vmatprep.subr.mxu0 0.0
    %971 = vmatpush1.xpose.msra.mxu0 0.0
    %972 = vmatprep.subr.mxu0 0.0
    %973 = vmatpush1.xpose.msra.mxu0 0.0
    %974 = vmatprep.subr.mxu0 0.0
    %975 = vmatpush1.xpose.msra.mxu0 0.0
    %976 = vmatprep.subr.mxu0 0.0
    %977 = vmatpush1.xpose.msra.mxu0 0.0
    %978 = vmatprep.subr.mxu0 0.0
    %979 = vmatpush1.xpose.msra.mxu0 0.0
    %980 = vmatprep.subr.mxu0 0.0
    %981 = vmatpush1.xpose.msra.mxu0 0.0
    %982 = vmatprep.subr.mxu0 0.0
    %v983 = vand.u32 %v576, 4294901760
    %984 = vmatpush1.xpose.msra.mxu0 %v983
    %985 = vmatprep.subr.mxu0 0.0
    %986 = vmatpush2.xpose.msra.mxu0 0.0
    %987 = vmatprep.subr.mxu0 0.0
    %988 = vmatpush2.xpose.msra.mxu0 0.0
    %989 = vmatprep.subr.mxu0 0.0
    %990 = vmatpush2.xpose.msra.mxu0 0.0
    %991 = vmatprep.subr.mxu0 0.0
    %992 = vmatpush2.xpose.msra.mxu0 0.0
    %993 = vmatprep.subr.mxu0 0.0
    %994 = vmatpush2.xpose.msra.mxu0 0.0
    %995 = vmatprep.subr.mxu0 0.0
    %996 = vmatpush2.xpose.msra.mxu0 0.0
    %997 = vmatprep.subr.mxu0 0.0
    %998 = vmatpush2.xpose.msra.mxu0 0.0
    %999 = vmatprep.subr.mxu0 0.0
    %1000 = vmatpush2.xpose.msra.mxu0 0.0
    %1001 = vmatprep.subr.mxu0 0.0
    %1002 = vmatpush2.xpose.msra.mxu0 0.0
    %1003 = vmatprep.subr.mxu0 0.0
    %1004 = vmatpush2.xpose.msra.mxu0 0.0
    %1005 = vmatprep.subr.mxu0 0.0
    %1006 = vmatpush2.xpose.msra.mxu0 0.0
    %1007 = vmatprep.subr.mxu0 0.0
    %1008 = vmatpush2.xpose.msra.mxu0 0.0
    %1009 = vmatprep.subr.mxu0 0.0
    %1010 = vmatpush2.xpose.msra.mxu0 0.0
    %1011 = vmatprep.subr.mxu0 0.0
    %1012 = vmatpush2.xpose.msra.mxu0 0.0
    %1013 = vmatprep.subr.mxu0 0.0
    %1014 = vmatpush2.xpose.msra.mxu0 0.0
    %1015 = vmatprep.subr.mxu0 0.0
    %1016 = vmatpush2.xpose.msra.mxu0 0.0
    %1017 = vmatprep.mubr.f32.mxu0 0.0
    %v1018 = vand.u32 %v574, 4294901760
    %1019 = vmatmul.mubr.f32.gmra.mxu0 %v1018
    %v1020 = vpop.f32.mrf.mxu0
    %v1021 = vadd.f32 %v949, %v1020
    %v1022 = vpop.f32.mrf.mxu0
    %1023 = vdwg.mxu0
    %vm1024 = vcmask 64512
    %v1025 = vsel %vm1024, %v1021, -inf
    %1026 = vmax.xlane.f32.xlu0 %v1025
    %v1027 = vpop.xlane.xlu0 %1026
    %v1028 = vsub.f32 %v1021, %v1027
    %v1029 = vmul.f32 %v1028, 1.442695
    %v1030 = vpow.pop %v1029
    %v1031 = vsel %vm1024, %v1030, 0.0
    %1032 = vadd.xlane.f32.xlu0 %v1031
    %v1033 = vpop.xlane.xlu0 %1032
    %v1034 = vrcp.pop %v1033
    %v1035 = vmul.f32 %v1030, %v1034
    %v1037 = vsel %vm1024, %v1035, 0
    %1039 = vmatprep.subr.mxu0 0.0
    %1040 = vmatpush1.msra.mxu0 0.0
    %1041 = vmatprep.subr.mxu0 0.0
    %1042 = vmatpush1.msra.mxu0 0.0
    %1043 = vmatprep.subr.mxu0 0.0
    %1044 = vmatpush1.msra.mxu0 0.0
    %1045 = vmatprep.subr.mxu0 0.0
    %1046 = vmatpush1.msra.mxu0 0.0
    %1047 = vmatprep.subr.mxu0 0.0
    %1048 = vmatpush1.msra.mxu0 0.0
    %1049 = vmatprep.subr.mxu0 0.0
    %1050 = vmatpush1.msra.mxu0 0.0
    %1051 = vmatprep.subr.mxu0 0.0
    %1052 = vmatpush1.msra.mxu0 0.0
    %1053 = vmatprep.subr.mxu0 0.0
    %1054 = vmatpush1.msra.mxu0 0.0
    %1055 = vmatprep.subr.mxu0 0.0
    %1056 = vmatpush1.msra.mxu0 0.0
    %1057 = vmatprep.subr.mxu0 0.0
    %1058 = vmatpush1.msra.mxu0 0.0
    %1059 = vmatprep.subr.mxu0 0.0
    %1060 = vmatpush1.msra.mxu0 0.0
    %1061 = vmatprep.subr.mxu0 0.0
    %1062 = vmatpush1.msra.mxu0 0.0
    %1063 = vmatprep.subr.mxu0 0.0
    %1064 = vmatpush1.msra.mxu0 0.0
    %1065 = vmatprep.subr.mxu0 0.0
    %1066 = vmatpush1.msra.mxu0 0.0
    %1067 = vmatprep.subr.mxu0 0.0
    %1068 = vmatpush1.msra.mxu0 0.0
    %1069 = vmatprep.subr.mxu0 0.0
    %v1070 = vand.u32 %v41, 4294901760
    %1071 = vmatpush1.msra.mxu0 %v1070
    %1072 = vmatprep.subr.mxu0 0.0
    %1073 = vmatpush2.msra.mxu0 0.0
    %1074 = vmatprep.subr.mxu0 0.0
    %1075 = vmatpush2.msra.mxu0 0.0
    %1076 = vmatprep.subr.mxu0 0.0
    %1077 = vmatpush2.msra.mxu0 0.0
    %1078 = vmatprep.subr.mxu0 0.0
    %1079 = vmatpush2.msra.mxu0 0.0
    %1080 = vmatprep.subr.mxu0 0.0
    %1081 = vmatpush2.msra.mxu0 0.0
    %1082 = vmatprep.subr.mxu0 0.0
    %1083 = vmatpush2.msra.mxu0 0.0
    %1084 = vmatprep.subr.mxu0 0.0
    %1085 = vmatpush2.msra.mxu0 0.0
    %1086 = vmatprep.subr.mxu0 0.0
    %1087 = vmatpush2.msra.mxu0 0.0
    %1088 = vmatprep.subr.mxu0 0.0
    %1089 = vmatpush2.msra.mxu0 0.0
    %1090 = vmatprep.subr.mxu0 0.0
    %1091 = vmatpush2.msra.mxu0 0.0
    %1092 = vmatprep.subr.mxu0 0.0
    %1093 = vmatpush2.msra.mxu0 0.0
    %1094 = vmatprep.subr.mxu0 0.0
    %1095 = vmatpush2.msra.mxu0 0.0
    %1096 = vmatprep.subr.mxu0 0.0
    %1097 = vmatpush2.msra.mxu0 0.0
    %1098 = vmatprep.subr.mxu0 0.0
    %1099 = vmatpush2.msra.mxu0 0.0
    %1100 = vmatprep.subr.mxu0 0.0
    %1101 = vmatpush2.msra.mxu0 0.0
    %1102 = vmatprep.subr.mxu0 0.0
    %1103 = vmatpush2.msra.mxu0 0.0
    %1104 = vmatprep.mubr.f32.mxu0 0.0
    %v1105 = vand.u32 %v1037, 4294901760
    %v1106 = vsub.f32 %v1037, %v1105
    %v1107 = vand.u32 %v1106, 4294901760
    %v1108 = vsub.f32 %v1106, %v1107
    %v1109 = vand.u32 %v1108, 4294901760
    %1110 = vmatmul.mubr.f32.gmra.mxu0 %v1109
    %v1111 = vpop.f32.mrf.mxu0
    %v1112 = vadd.f32 0.0, %v1111
    %v1113 = vpop.f32.mrf.mxu0
    %1114 = vdwg.mxu0
    %1115 = vmatprep.subr.mxu0 0.0
    %1116 = vmatpush1.msra.mxu0 0.0
    %1117 = vmatprep.subr.mxu0 0.0
    %1118 = vmatpush1.msra.mxu0 0.0
    %1119 = vmatprep.subr.mxu0 0.0
    %1120 = vmatpush1.msra.mxu0 0.0
    %1121 = vmatprep.subr.mxu0 0.0
    %1122 = vmatpush1.msra.mxu0 0.0
    %1123 = vmatprep.subr.mxu0 0.0
    %1124 = vmatpush1.msra.mxu0 0.0
    %1125 = vmatprep.subr.mxu0 0.0
    %1126 = vmatpush1.msra.mxu0 0.0
    %1127 = vmatprep.subr.mxu0 0.0
    %1128 = vmatpush1.msra.mxu0 0.0
    %1129 = vmatprep.subr.mxu0 0.0
    %1130 = vmatpush1.msra.mxu0 0.0
    %1131 = vmatprep.subr.mxu0 0.0
    %1132 = vmatpush1.msra.mxu0 0.0
    %1133 = vmatprep.subr.mxu0 0.0
    %1134 = vmatpush1.msra.mxu0 0.0
    %1135 = vmatprep.subr.mxu0 0.0
    %1136 = vmatpush1.msra.mxu0 0.0
    %1137 = vmatprep.subr.mxu0 0.0
    %1138 = vmatpush1.msra.mxu0 0.0
    %1139 = vmatprep.subr.mxu0 0.0
    %1140 = vmatpush1.msra.mxu0 0.0
    %1141 = vmatprep.subr.mxu0 0.0
    %1142 = vmatpush1.msra.mxu0 0.0
    %1143 = vmatprep.subr.mxu0 0.0
    %1144 = vmatpush1.msra.mxu0 0.0
    %1145 = vmatprep.subr.mxu0 0.0
    %v1146 = vand.u32 %v41, 4294901760
    %v1147 = vsub.f32 %v41, %v1146
    %v1148 = vand.u32 %v1147, 4294901760
    %v1149 = vsub.f32 %v1147, %v1148
    %v1150 = vand.u32 %v1149, 4294901760
    %1151 = vmatpush1.msra.mxu0 %v1150
    %1152 = vmatprep.subr.mxu0 0.0
    %1153 = vmatpush2.msra.mxu0 0.0
    %1154 = vmatprep.subr.mxu0 0.0
    %1155 = vmatpush2.msra.mxu0 0.0
    %1156 = vmatprep.subr.mxu0 0.0
    %1157 = vmatpush2.msra.mxu0 0.0
    %1158 = vmatprep.subr.mxu0 0.0
    %1159 = vmatpush2.msra.mxu0 0.0
    %1160 = vmatprep.subr.mxu0 0.0
    %1161 = vmatpush2.msra.mxu0 0.0
    %1162 = vmatprep.subr.mxu0 0.0
    %1163 = vmatpush2.msra.mxu0 0.0
    %1164 = vmatprep.subr.mxu0 0.0
    %1165 = vmatpush2.msra.mxu0 0.0
    %1166 = vmatprep.subr.mxu0 0.0
    %1167 = vmatpush2.msra.mxu0 0.0
    %1168 = vmatprep.subr.mxu0 0.0
    %1169 = vmatpush2.msra.mxu0 0.0
    %1170 = vmatprep.subr.mxu0 0.0
    %1171 = vmatpush2.msra.mxu0 0.0
    %1172 = vmatprep.subr.mxu0 0.0
    %1173 = vmatpush2.msra.mxu0 0.0
    %1174 = vmatprep.subr.mxu0 0.0
    %1175 = vmatpush2.msra.mxu0 0.0
    %1176 = vmatprep.subr.mxu0 0.0
    %1177 = vmatpush2.msra.mxu0 0.0
    %1178 = vmatprep.subr.mxu0 0.0
    %1179 = vmatpush2.msra.mxu0 0.0
    %1180 = vmatprep.subr.mxu0 0.0
    %1181 = vmatpush2.msra.mxu0 0.0
    %1182 = vmatprep.subr.mxu0 0.0
    %1183 = vmatpush2.msra.mxu0 0.0
    %1184 = vmatprep.mubr.f32.mxu0 0.0
    %v1185 = vand.u32 %v1037, 4294901760
    %1186 = vmatmul.mubr.f32.gmra.mxu0 %v1185
    %v1187 = vpop.f32.mrf.mxu0
    %v1188 = vadd.f32 %v1112, %v1187
    %v1189 = vpop.f32.mrf.mxu0
    %1190 = vdwg.mxu0
    %1191 = vmatprep.subr.mxu0 0.0
    %1192 = vmatpush1.msra.mxu0 0.0
    %1193 = vmatprep.subr.mxu0 0.0
    %1194 = vmatpush1.msra.mxu0 0.0
    %1195 = vmatprep.subr.mxu0 0.0
    %1196 = vmatpush1.msra.mxu0 0.0
    %1197 = vmatprep.subr.mxu0 0.0
    %1198 = vmatpush1.msra.mxu0 0.0
    %1199 = vmatprep.subr.mxu0 0.0
    %1200 = vmatpush1.msra.mxu0 0.0
    %1201 = vmatprep.subr.mxu0 0.0
    %1202 = vmatpush1.msra.mxu0 0.0
    %1203 = vmatprep.subr.mxu0 0.0
    %1204 = vmatpush1.msra.mxu0 0.0
    %1205 = vmatprep.subr.mxu0 0.0
    %1206 = vmatpush1.msra.mxu0 0.0
    %1207 = vmatprep.subr.mxu0 0.0
    %1208 = vmatpush1.msra.mxu0 0.0
    %1209 = vmatprep.subr.mxu0 0.0
    %1210 = vmatpush1.msra.mxu0 0.0
    %1211 = vmatprep.subr.mxu0 0.0
    %1212 = vmatpush1.msra.mxu0 0.0
    %1213 = vmatprep.subr.mxu0 0.0
    %1214 = vmatpush1.msra.mxu0 0.0
    %1215 = vmatprep.subr.mxu0 0.0
    %1216 = vmatpush1.msra.mxu0 0.0
    %1217 = vmatprep.subr.mxu0 0.0
    %1218 = vmatpush1.msra.mxu0 0.0
    %1219 = vmatprep.subr.mxu0 0.0
    %1220 = vmatpush1.msra.mxu0 0.0
    %1221 = vmatprep.subr.mxu0 0.0
    %v1222 = vand.u32 %v41, 4294901760
    %v1223 = vsub.f32 %v41, %v1222
    %1224 = vmatpush1.msra.mxu0 %v1223
    %1225 = vmatprep.subr.mxu0 0.0
    %1226 = vmatpush2.msra.mxu0 0.0
    %1227 = vmatprep.subr.mxu0 0.0
    %1228 = vmatpush2.msra.mxu0 0.0
    %1229 = vmatprep.subr.mxu0 0.0
    %1230 = vmatpush2.msra.mxu0 0.0
    %1231 = vmatprep.subr.mxu0 0.0
    %1232 = vmatpush2.msra.mxu0 0.0
    %1233 = vmatprep.subr.mxu0 0.0
    %1234 = vmatpush2.msra.mxu0 0.0
    %1235 = vmatprep.subr.mxu0 0.0
    %1236 = vmatpush2.msra.mxu0 0.0
    %1237 = vmatprep.subr.mxu0 0.0
    %1238 = vmatpush2.msra.mxu0 0.0
    %1239 = vmatprep.subr.mxu0 0.0
    %1240 = vmatpush2.msra.mxu0 0.0
    %1241 = vmatprep.subr.mxu0 0.0
    %1242 = vmatpush2.msra.mxu0 0.0
    %1243 = vmatprep.subr.mxu0 0.0
    %1244 = vmatpush2.msra.mxu0 0.0
    %1245 = vmatprep.subr.mxu0 0.0
    %1246 = vmatpush2.msra.mxu0 0.0
    %1247 = vmatprep.subr.mxu0 0.0
    %1248 = vmatpush2.msra.mxu0 0.0
    %1249 = vmatprep.subr.mxu0 0.0
    %1250 = vmatpush2.msra.mxu0 0.0
    %1251 = vmatprep.subr.mxu0 0.0
    %1252 = vmatpush2.msra.mxu0 0.0
    %1253 = vmatprep.subr.mxu0 0.0
    %1254 = vmatpush2.msra.mxu0 0.0
    %1255 = vmatprep.subr.mxu0 0.0
    %1256 = vmatpush2.msra.mxu0 0.0
    %1257 = vmatprep.mubr.f32.mxu0 0.0
    %v1258 = vand.u32 %v1037, 4294901760
    %v1259 = vsub.f32 %v1037, %v1258
    %1260 = vmatmul.mubr.f32.gmra.mxu0 %v1259
    %v1261 = vpop.f32.mrf.mxu0
    %v1262 = vadd.f32 %v1188, %v1261
    %v1263 = vpop.f32.mrf.mxu0
    %1264 = vdwg.mxu0
    %1265 = vmatprep.subr.mxu0 0.0
    %1266 = vmatpush1.msra.mxu0 0.0
    %1267 = vmatprep.subr.mxu0 0.0
    %1268 = vmatpush1.msra.mxu0 0.0
    %1269 = vmatprep.subr.mxu0 0.0
    %1270 = vmatpush1.msra.mxu0 0.0
    %1271 = vmatprep.subr.mxu0 0.0
    %1272 = vmatpush1.msra.mxu0 0.0
    %1273 = vmatprep.subr.mxu0 0.0
    %1274 = vmatpush1.msra.mxu0 0.0
    %1275 = vmatprep.subr.mxu0 0.0
    %1276 = vmatpush1.msra.mxu0 0.0
    %1277 = vmatprep.subr.mxu0 0.0
    %1278 = vmatpush1.msra.mxu0 0.0
    %1279 = vmatprep.subr.mxu0 0.0
    %1280 = vmatpush1.msra.mxu0 0.0
    %1281 = vmatprep.subr.mxu0 0.0
    %1282 = vmatpush1.msra.mxu0 0.0
    %1283 = vmatprep.subr.mxu0 0.0
    %1284 = vmatpush1.msra.mxu0 0.0
    %1285 = vmatprep.subr.mxu0 0.0
    %1286 = vmatpush1.msra.mxu0 0.0
    %1287 = vmatprep.subr.mxu0 0.0
    %1288 = vmatpush1.msra.mxu0 0.0
    %1289 = vmatprep.subr.mxu0 0.0
    %1290 = vmatpush1.msra.mxu0 0.0
    %1291 = vmatprep.subr.mxu0 0.0
    %1292 = vmatpush1.msra.mxu0 0.0
    %1293 = vmatprep.subr.mxu0 0.0
    %1294 = vmatpush1.msra.mxu0 0.0
    %1295 = vmatprep.subr.mxu0 0.0
    %v1296 = vand.u32 %v41, 4294901760
    %1297 = vmatpush1.msra.mxu0 %v1296
    %1298 = vmatprep.subr.mxu0 0.0
    %1299 = vmatpush2.msra.mxu0 0.0
    %1300 = vmatprep.subr.mxu0 0.0
    %1301 = vmatpush2.msra.mxu0 0.0
    %1302 = vmatprep.subr.mxu0 0.0
    %1303 = vmatpush2.msra.mxu0 0.0
    %1304 = vmatprep.subr.mxu0 0.0
    %1305 = vmatpush2.msra.mxu0 0.0
    %1306 = vmatprep.subr.mxu0 0.0
    %1307 = vmatpush2.msra.mxu0 0.0
    %1308 = vmatprep.subr.mxu0 0.0
    %1309 = vmatpush2.msra.mxu0 0.0
    %1310 = vmatprep.subr.mxu0 0.0
    %1311 = vmatpush2.msra.mxu0 0.0
    %1312 = vmatprep.subr.mxu0 0.0
    %1313 = vmatpush2.msra.mxu0 0.0
    %1314 = vmatprep.subr.mxu0 0.0
    %1315 = vmatpush2.msra.mxu0 0.0
    %1316 = vmatprep.subr.mxu0 0.0
    %1317 = vmatpush2.msra.mxu0 0.0
    %1318 = vmatprep.subr.mxu0 0.0
    %1319 = vmatpush2.msra.mxu0 0.0
    %1320 = vmatprep.subr.mxu0 0.0
    %1321 = vmatpush2.msra.mxu0 0.0
    %1322 = vmatprep.subr.mxu0 0.0
    %1323 = vmatpush2.msra.mxu0 0.0
    %1324 = vmatprep.subr.mxu0 0.0
    %1325 = vmatpush2.msra.mxu0 0.0
    %1326 = vmatprep.subr.mxu0 0.0
    %1327 = vmatpush2.msra.mxu0 0.0
    %1328 = vmatprep.subr.mxu0 0.0
    %1329 = vmatpush2.msra.mxu0 0.0
    %1330 = vmatprep.mubr.f32.mxu0 0.0
    %v1331 = vand.u32 %v1037, 4294901760
    %v1332 = vsub.f32 %v1037, %v1331
    %v1333 = vand.u32 %v1332, 4294901760
    %1334 = vmatmul.mubr.f32.gmra.mxu0 %v1333
    %v1335 = vpop.f32.mrf.mxu0
    %v1336 = vadd.f32 %v1262, %v1335
    %v1337 = vpop.f32.mrf.mxu0
    %1338 = vdwg.mxu0
    %1339 = vmatprep.subr.mxu0 0.0
    %1340 = vmatpush1.msra.mxu0 0.0
    %1341 = vmatprep.subr.mxu0 0.0
    %1342 = vmatpush1.msra.mxu0 0.0
    %1343 = vmatprep.subr.mxu0 0.0
    %1344 = vmatpush1.msra.mxu0 0.0
    %1345 = vmatprep.subr.mxu0 0.0
    %1346 = vmatpush1.msra.mxu0 0.0
    %1347 = vmatprep.subr.mxu0 0.0
    %1348 = vmatpush1.msra.mxu0 0.0
    %1349 = vmatprep.subr.mxu0 0.0
    %1350 = vmatpush1.msra.mxu0 0.0
    %1351 = vmatprep.subr.mxu0 0.0
    %1352 = vmatpush1.msra.mxu0 0.0
    %1353 = vmatprep.subr.mxu0 0.0
    %1354 = vmatpush1.msra.mxu0 0.0
    %1355 = vmatprep.subr.mxu0 0.0
    %1356 = vmatpush1.msra.mxu0 0.0
    %1357 = vmatprep.subr.mxu0 0.0
    %1358 = vmatpush1.msra.mxu0 0.0
    %1359 = vmatprep.subr.mxu0 0.0
    %1360 = vmatpush1.msra.mxu0 0.0
    %1361 = vmatprep.subr.mxu0 0.0
    %1362 = vmatpush1.msra.mxu0 0.0
    %1363 = vmatprep.subr.mxu0 0.0
    %1364 = vmatpush1.msra.mxu0 0.0
    %1365 = vmatprep.subr.mxu0 0.0
    %1366 = vmatpush1.msra.mxu0 0.0
    %1367 = vmatprep.subr.mxu0 0.0
    %1368 = vmatpush1.msra.mxu0 0.0
    %1369 = vmatprep.subr.mxu0 0.0
    %v1370 = vand.u32 %v41, 4294901760
    %v1371 = vsub.f32 %v41, %v1370
    %v1372 = vand.u32 %v1371, 4294901760
    %1373 = vmatpush1.msra.mxu0 %v1372
    %1374 = vmatprep.subr.mxu0 0.0
    %1375 = vmatpush2.msra.mxu0 0.0
    %1376 = vmatprep.subr.mxu0 0.0
    %1377 = vmatpush2.msra.mxu0 0.0
    %1378 = vmatprep.subr.mxu0 0.0
    %1379 = vmatpush2.msra.mxu0 0.0
    %1380 = vmatprep.subr.mxu0 0.0
    %1381 = vmatpush2.msra.mxu0 0.0
    %1382 = vmatprep.subr.mxu0 0.0
    %1383 = vmatpush2.msra.mxu0 0.0
    %1384 = vmatprep.subr.mxu0 0.0
    %1385 = vmatpush2.msra.mxu0 0.0
    %1386 = vmatprep.subr.mxu0 0.0
    %1387 = vmatpush2.msra.mxu0 0.0
    %1388 = vmatprep.subr.mxu0 0.0
    %1389 = vmatpush2.msra.mxu0 0.0
    %1390 = vmatprep.subr.mxu0 0.0
    %1391 = vmatpush2.msra.mxu0 0.0
    %1392 = vmatprep.subr.mxu0 0.0
    %1393 = vmatpush2.msra.mxu0 0.0
    %1394 = vmatprep.subr.mxu0 0.0
    %1395 = vmatpush2.msra.mxu0 0.0
    %1396 = vmatprep.subr.mxu0 0.0
    %1397 = vmatpush2.msra.mxu0 0.0
    %1398 = vmatprep.subr.mxu0 0.0
    %1399 = vmatpush2.msra.mxu0 0.0
    %1400 = vmatprep.subr.mxu0 0.0
    %1401 = vmatpush2.msra.mxu0 0.0
    %1402 = vmatprep.subr.mxu0 0.0
    %1403 = vmatpush2.msra.mxu0 0.0
    %1404 = vmatprep.subr.mxu0 0.0
    %1405 = vmatpush2.msra.mxu0 0.0
    %1406 = vmatprep.mubr.f32.mxu0 0.0
    %v1407 = vand.u32 %v1037, 4294901760
    %1408 = vmatmul.mubr.f32.gmra.mxu0 %v1407
    %v1409 = vpop.f32.mrf.mxu0
    %v1410 = vadd.f32 %v1336, %v1409
    %v1411 = vpop.f32.mrf.mxu0
    %1412 = vdwg.mxu0
    %1413 = vmatprep.subr.mxu0 0.0
    %1414 = vmatpush1.msra.mxu0 0.0
    %1415 = vmatprep.subr.mxu0 0.0
    %1416 = vmatpush1.msra.mxu0 0.0
    %1417 = vmatprep.subr.mxu0 0.0
    %1418 = vmatpush1.msra.mxu0 0.0
    %1419 = vmatprep.subr.mxu0 0.0
    %1420 = vmatpush1.msra.mxu0 0.0
    %1421 = vmatprep.subr.mxu0 0.0
    %1422 = vmatpush1.msra.mxu0 0.0
    %1423 = vmatprep.subr.mxu0 0.0
    %1424 = vmatpush1.msra.mxu0 0.0
    %1425 = vmatprep.subr.mxu0 0.0
    %1426 = vmatpush1.msra.mxu0 0.0
    %1427 = vmatprep.subr.mxu0 0.0
    %1428 = vmatpush1.msra.mxu0 0.0
    %1429 = vmatprep.subr.mxu0 0.0
    %1430 = vmatpush1.msra.mxu0 0.0
    %1431 = vmatprep.subr.mxu0 0.0
    %1432 = vmatpush1.msra.mxu0 0.0
    %1433 = vmatprep.subr.mxu0 0.0
    %1434 = vmatpush1.msra.mxu0 0.0
    %1435 = vmatprep.subr.mxu0 0.0
    %1436 = vmatpush1.msra.mxu0 0.0
    %1437 = vmatprep.subr.mxu0 0.0
    %1438 = vmatpush1.msra.mxu0 0.0
    %1439 = vmatprep.subr.mxu0 0.0
    %1440 = vmatpush1.msra.mxu0 0.0
    %1441 = vmatprep.subr.mxu0 0.0
    %1442 = vmatpush1.msra.mxu0 0.0
    %1443 = vmatprep.subr.mxu0 0.0
    %v1444 = vand.u32 %v41, 4294901760
    %1445 = vmatpush1.msra.mxu0 %v1444
    %1446 = vmatprep.subr.mxu0 0.0
    %1447 = vmatpush2.msra.mxu0 0.0
    %1448 = vmatprep.subr.mxu0 0.0
    %1449 = vmatpush2.msra.mxu0 0.0
    %1450 = vmatprep.subr.mxu0 0.0
    %1451 = vmatpush2.msra.mxu0 0.0
    %1452 = vmatprep.subr.mxu0 0.0
    %1453 = vmatpush2.msra.mxu0 0.0
    %1454 = vmatprep.subr.mxu0 0.0
    %1455 = vmatpush2.msra.mxu0 0.0
    %1456 = vmatprep.subr.mxu0 0.0
    %1457 = vmatpush2.msra.mxu0 0.0
    %1458 = vmatprep.subr.mxu0 0.0
    %1459 = vmatpush2.msra.mxu0 0.0
    %1460 = vmatprep.subr.mxu0 0.0
    %1461 = vmatpush2.msra.mxu0 0.0
    %1462 = vmatprep.subr.mxu0 0.0
    %1463 = vmatpush2.msra.mxu0 0.0
    %1464 = vmatprep.subr.mxu0 0.0
    %1465 = vmatpush2.msra.mxu0 0.0
    %1466 = vmatprep.subr.mxu0 0.0
    %1467 = vmatpush2.msra.mxu0 0.0
    %1468 = vmatprep.subr.mxu0 0.0
    %1469 = vmatpush2.msra.mxu0 0.0
    %1470 = vmatprep.subr.mxu0 0.0
    %1471 = vmatpush2.msra.mxu0 0.0
    %1472 = vmatprep.subr.mxu0 0.0
    %1473 = vmatpush2.msra.mxu0 0.0
    %1474 = vmatprep.subr.mxu0 0.0
    %1475 = vmatpush2.msra.mxu0 0.0
    %1476 = vmatprep.subr.mxu0 0.0
    %1477 = vmatpush2.msra.mxu0 0.0
    %1478 = vmatprep.mubr.f32.mxu0 0.0
    %v1479 = vand.u32 %v1037, 4294901760
    %1480 = vmatmul.mubr.f32.gmra.mxu0 %v1479
    %v1481 = vpop.f32.mrf.mxu0
    %v1482 = vadd.f32 %v1410, %v1481
    %v1483 = vpop.f32.mrf.mxu0
    %1484 = vdwg.mxu0
    %1485 = vst.msk [vmem:[#allocation7] sm:$0xff] %vm573, %v1482
    // Predicated region
    $region22: #{tpu_custom_call.1} parent=1 // pred_check
      _
    $region23: #{tpu_custom_call.1} parent=1 // pred_check_branch
      %1487 = sbr.rel (0) target = $region25
    $region24: #{tpu_custom_call.1} parent=1 // pred_region
      %s1489 = ssub.s32 128, 128
      %1490 = vsyncadd [#allocation4], %s1489
      %s1492 = sshll.u32 [#allocation7], 4
      %s1493 = int_to_ptr.vmem [resolvable:$true] %s1492
      %1495 = dma.vmem_to_hbm [thread:$0]  %s1493, 128, %s3, [#allocation4]
    $region25: #{tpu_custom_call.1} parent=1 // pred_fallthru
      _
    // Predicated region
    $region26: #{tpu_custom_call.1} parent=1 // pred_check
      _
    $region27: #{tpu_custom_call.1} parent=1 // pred_check_branch
      %1497 = sbr.rel (0) target = $region29
    $region28: #{tpu_custom_call.1} parent=1 // pred_region
      %1498 = dma.done [#allocation4], 128
    $region29: #{tpu_custom_call.1} parent=1 // pred_fallthru
      _
    %1499 = vsyncpa [#allocation3], 1
    %1500 = vsyncpa [#allocation6], 1
    %1501 = vsyncpa [#allocation4], 1

</llo_original>
